<compile_context>
chip_gen: v6e
topology: v6e:2x2x1
jax: 0.10.0
libtpu: 0.0.40
codegen_flags: <defaults>
</compile_context>

<pallas_src>
import jax
import jax.numpy as jnp
from jax.experimental import pallas as pl
from jax.experimental.pallas import tpu as pltpu


def _make_single_sweep_kernel(TN, TV):
    """Whole vocab fits in one tile (TV == V): direct logsumexp, no scratch."""

    def kernel(logits_ref, tgt_ref, w_ref, out_ref):
        x_raw = logits_ref[...]                               # (TN, TV) input dtype
        x = x_raw.astype(jnp.float32)
        local = jax.lax.broadcasted_iota(jnp.int32, (TN, TV), 1)

        m = jnp.max(x, axis=-1, keepdims=True)                # (TN, 1)
        lse = m + jnp.log(jnp.sum(jnp.exp(x - m), axis=-1, keepdims=True))

        # Target-logit gather: select in the INPUT dtype (exact: at most one
        # nonzero lane per row), upcast only the (TN, 1) result.
        hit = local == tgt_ref[...]
        t = jnp.sum(jnp.where(hit, x_raw, jnp.zeros((), x_raw.dtype)),
                    axis=-1, keepdims=True).astype(jnp.float32)

        out_ref[...] = (lse - t) * w_ref[...]

    return kernel


def _make_online_kernel(V, TN, TV):
    """Multiple vocab tiles: online logsumexp with (TN, 1) f32 scratch."""
    nv = pl.cdiv(V, TV)
    lane_edge = (V % TV) != 0

    def kernel(logits_ref, tgt_ref, w_ref, out_ref, m_sc, l_sc, t_sc):
        v_idx = pl.program_id(1)

        @pl.when(v_idx == 0)
        def _init():
            m_sc[...] = jnp.full((TN, 1), -jnp.inf, jnp.float32)
            l_sc[...] = jnp.zeros((TN, 1), jnp.float32)
            t_sc[...] = jnp.zeros((TN, 1), jnp.float32)

        x_raw = logits_ref[...]                               # (TN, TV)
        x = x_raw.astype(jnp.float32)
        tgt = tgt_ref[...]                                    # (TN, 1) int32
        local = jax.lax.broadcasted_iota(jnp.int32, (TN, TV), 1)

        if lane_edge:
            # Only needed when V % TV != 0: mask lanes past the vocabulary.
            x_lse = jnp.where(local < (V - v_idx * TV), x, -jnp.inf)
        else:
            x_lse = x

        # --- online logsumexp over vocab tiles (lane reduction) ---
        tile_max = jnp.max(x_lse, axis=-1, keepdims=True)     # (TN, 1)
        m_prev = m_sc[...]
        m_new = jnp.maximum(m_prev, tile_max)
        alpha = jnp.exp(m_prev - m_new)
        p = jnp.exp(x_lse - m_new)                            # (TN, TV)
        l_sc[...] = alpha * l_sc[...] + jnp.sum(p, axis=-1, keepdims=True)
        m_sc[...] = m_new

        # Fused target-logit extraction: lane-local iota vs per-row shifted
        # target (no full-tile class-id tensor), select in input dtype.
        hit = local == (tgt - v_idx * TV)
        t_sc[...] += jnp.sum(jnp.where(hit, x_raw, jnp.zeros((), x_raw.dtype)),
                             axis=-1, keepdims=True).astype(jnp.float32)

        @pl.when(v_idx == nv - 1)
        def _finalize():
            lse = m_sc[...] + jnp.log(l_sc[...])
            out_ref[...] = (lse - t_sc[...]) * w_ref[...]

    return kernel


def sequence_length_cross_entropy(inputs, targets, valid_lengths, *, tn=None, tv=None):
    """inputs: (S, B, V) float; targets: (B, S) int; valid_lengths: (B,) int -> (B,) f32."""
    S, B, V = inputs.shape
    N = S * B
    itemsize = jnp.dtype(inputs.dtype).itemsize

    # (seq, batch) fused into one row axis: contiguous reshape, no copy.
    logits2d = inputs.reshape(N, V)

    # Tiny side inputs: per-row targets + ONE precombined weight mask
    # (row r = s*B + b to match the reshape above).
    tgt_sb = jnp.transpose(targets.astype(jnp.int32), (1, 0))           # (S, B)
    pos = jnp.arange(S, dtype=jnp.int32)[:, None]
    mask = jnp.logical_and(pos < valid_lengths.astype(jnp.int32)[None, :],
                           tgt_sb != -100)
    tgt2d = tgt_sb.reshape(N, 1)
    w2d = mask.astype(jnp.float32).reshape(N, 1)

    # ---- tile heuristics ----------------------------------------------------
    budget = 4 * 1024 * 1024                  # logits block bytes (~85%+ roofline)
    if tv is None:
        if 8 * V * itemsize <= budget:
            tv = V                            # full-vocab sweep: no online LSE
        else:
            tv = max(128, (budget // (8 * itemsize)) // 128 * 128)
    tv = int(min(int(tv), V))
    if tv < V:
        tv = max(128, (tv // 128) * 128)      # lane-aligned partial vocab tile
        if tv >= V:
            tv = V

    if tn is None:
        tn = budget // (tv * itemsize)
    if N <= 8:
        tn = N
    else:
        cap = N if N % 8 == 0 else (N // 8) * 8
        tn = int(min(max(8, (int(tn) // 8) * 8), cap))

    nn = pl.cdiv(N, tn)
    nv = pl.cdiv(V, tv)

    # VMEM: double-buffered logits block + f32 tile temporaries + headroom,
    # capped at 48 MiB so the same config fits v7x (64 MiB physical) too.
    blk = tn * tv * itemsize
    vmem_limit = int(min(48 * 1024 * 1024,
                         max(32 * 1024 * 1024,
                             2 * blk + 3 * tn * tv * 4 + (1 << 20))))

    out_shape = jax.ShapeDtypeStruct((N, 1), jnp.float32)

    if nv == 1:
        kernel = _make_single_sweep_kernel(tn, tv)
        grid_spec = pltpu.PrefetchScalarGridSpec(
            num_scalar_prefetch=0,
            grid=(nn,),
            in_specs=[
                pl.BlockSpec((tn, tv), lambda n: (n, 0)),    # logits
                pl.BlockSpec((tn, 1), lambda n: (n, 0)),     # targets
                pl.BlockSpec((tn, 1), lambda n: (n, 0)),     # mask weight
            ],
            out_specs=pl.BlockSpec((tn, 1), lambda n: (n, 0)),
        )
        dims = ("parallel",)
    else:
        kernel = _make_online_kernel(V, tn, tv)
        grid_spec = pltpu.PrefetchScalarGridSpec(
            num_scalar_prefetch=0,
            grid=(nn, nv),
            in_specs=[
                pl.BlockSpec((tn, tv), lambda n, v: (n, v)),  # logits
                pl.BlockSpec((tn, 1), lambda n, v: (n, 0)),   # targets (fetched once per n)
                pl.BlockSpec((tn, 1), lambda n, v: (n, 0)),   # mask weight
            ],
            out_specs=pl.BlockSpec((tn, 1), lambda n, v: (n, 0)),
            scratch_shapes=[pltpu.VMEM((tn, 1), jnp.float32),   # running max
                            pltpu.VMEM((tn, 1), jnp.float32),   # running sum-exp
                            pltpu.VMEM((tn, 1), jnp.float32)],  # target logit
        )
        dims = ("parallel", "arbitrary")

    per_row = pl.pallas_call(
        kernel,
        out_shape=out_shape,
        grid_spec=grid_spec,
        compiler_params=pltpu.CompilerParams(
            dimension_semantics=dims,
            vmem_limit_bytes=vmem_limit,
        ),
    )(logits2d, tgt2d, w2d)

    # Tiny final reduce in JAX: mean over the full seq_len (matches PyTorch).
    return per_row.reshape(S, B).sum(axis=0) * (1.0 / S)


def _reference(inputs, targets, valid_lengths):
    """Pure-JAX reference mirroring the PyTorch module."""
    S, B, V = inputs.shape
    logits = jnp.transpose(inputs, (1, 0, 2)).astype(jnp.float32)       # (B, S, V)
    logp = jax.nn.log_softmax(logits, axis=-1)
    tgt_safe = jnp.where(targets == -100, 0, targets).astype(jnp.int32)
    nll = -jnp.take_along_axis(logp, tgt_safe[..., None], axis=-1)[..., 0]
    nll = jnp.where(targets == -100, 0.0, nll)                          # ignore_index
    mask = (jnp.arange(S)[None, :] < valid_lengths[:, None]).astype(jnp.float32)
    return (nll * mask).mean(axis=1)


if __name__ == "__main__":
    key = jax.random.PRNGKey(0)

    # Case 1: small module-sized shapes, single full-vocab sweep path.
    k1, k2 = jax.random.split(key)
    S, B, V = 8, 2, 128
    inputs = jax.random.normal(k1, (S, B, V), dtype=jnp.float32)
    targets = jax.random.randint(k2, (B, S), 0, V, dtype=jnp.int32)
    targets = targets.at[0, 3].set(-100)            # exercise ignore_index
    valid_lengths = jnp.array([5, 8], dtype=jnp.int32)

    out = jax.block_until_ready(
        sequence_length_cross_entropy(inputs, targets, valid_lengths))
    ref = _reference(inputs, targets, valid_lengths)
    assert out.shape == (B,)
    assert jnp.allclose(out, ref, rtol=1e-5, atol=1e-5), (out, ref)

    # Case 2: forced small tiles to exercise the online-LSE path and the
    # partial edge row tile (N = 20 rows, TN = 8).
    k3, k4 = jax.random.split(k1)
    S2, B2, V2 = 10, 2, 256
    inputs2 = jax.random.normal(k3, (S2, B2, V2), dtype=jnp.float32)
    targets2 = jax.random.randint(k4, (B2, S2), 0, V2, dtype=jnp.int32)
    targets2 = targets2.at[1, 0].set(-100)
    valid_lengths2 = jnp.array([7, 10], dtype=jnp.int32)

    out2 = jax.block_until_ready(
        sequence_length_cross_entropy(inputs2, targets2, valid_lengths2, tn=8, tv=128))
    ref2 = _reference(inputs2, targets2, valid_lengths2)
    assert jnp.allclose(out2, ref2, rtol=1e-5, atol=1e-5), (out2, ref2)

    # Case 3: bf16 logits, non-128-aligned vocab edge tile (V=384, TV=256),
    # exercises the input-dtype target select + lane-edge mask.
    k5, k6 = jax.random.split(k3)
    S3, B3, V3 = 12, 3, 384
    inputs3 = jax.random.normal(k5, (S3, B3, V3), dtype=jnp.bfloat16)
    targets3 = jax.random.randint(k6, (B3, S3), 0, V3, dtype=jnp.int32)
    targets3 = targets3.at[2, 5].set(-100)
    valid_lengths3 = jnp.array([9, 12, 4], dtype=jnp.int32)

    out3 = jax.block_until_ready(
        sequence_length_cross_entropy(inputs3, targets3, valid_lengths3, tn=16, tv=256))
    ref3 = _reference(inputs3, targets3, valid_lengths3)
    assert jnp.allclose(out3, ref3, rtol=1e-4, atol=1e-4), (out3, ref3)

    print("KERNEL_OK")
</pallas_src>

<mosaic_0001>
module attributes {stable_mosaic.version = 11 : i64} {
  func.func @kernel(%arg0: i32, %arg1: memref<16x128xf32, #tpu.memory_space<vmem>>, %arg2: memref<16x1xi32, #tpu.memory_space<vmem>>, %arg3: memref<16x1xf32, #tpu.memory_space<vmem>>, %arg4: memref<16x1xf32, #tpu.memory_space<vmem>>) attributes {dimension_semantics = [#tpu.dimension_semantics<parallel>], iteration_bounds = array<i64: 1>, scalar_prefetch = 0 : i64, scratch_operands = 0 : i64, tpu.core_type = #tpu.core_type<tc>, window_params = [{transform_indices = @transform_0, window_bounds = array<i64: 16, 128>}, {transform_indices = @transform_1, window_bounds = array<i64: 16, 1>}, {transform_indices = @transform_2, window_bounds = array<i64: 16, 1>}, {transform_indices = @transform_3, window_bounds = array<i64: 16, 1>}]} {
    %c0 = arith.constant 0 : index
    %c0_0 = arith.constant 0 : index
    %0 = vector.load %arg1[%c0, %c0_0] : memref<16x128xf32, #tpu.memory_space<vmem>>, vector<16x128xf32>
    %1 = tpu.iota {dimensions = array<i32: 1>} : vector<16x128xi32>
    %cst = arith.constant dense<0xFF800000> : vector<16xf32>
    %2 = vector.multi_reduction <maximumf>, %0, %cst [1] : vector<16x128xf32> to vector<16xf32>
    %3 = vector.shape_cast %2 : vector<16xf32> to vector<16x1xf32>
    %4 = vector.broadcast %3 : vector<16x1xf32> to vector<16x128xf32>
    %5 = arith.subf %0, %4 : vector<16x128xf32>
    %6 = math.exp %5 : vector<16x128xf32>
    %cst_1 = arith.constant dense<0.000000e+00> : vector<16xf32>
    %7 = vector.multi_reduction <add>, %6, %cst_1 [1] : vector<16x128xf32> to vector<16xf32>
    %8 = vector.shape_cast %7 : vector<16xf32> to vector<16x1xf32>
    %9 = math.log %8 : vector<16x1xf32>
    %10 = arith.addf %3, %9 : vector<16x1xf32>
    %c0_2 = arith.constant 0 : index
    %c0_3 = arith.constant 0 : index
    %11 = vector.load %arg2[%c0_2, %c0_3] : memref<16x1xi32, #tpu.memory_space<vmem>>, vector<16x1xi32>
    %12 = vector.broadcast %11 : vector<16x1xi32> to vector<16x128xi32>
    %13 = arith.cmpi eq, %1, %12 : vector<16x128xi32>
    %cst_4 = arith.constant 0.000000e+00 : f32
    %14 = vector.broadcast %cst_4 : f32 to vector<16x128xf32>
    %15 = arith.select %13, %0, %14 : vector<16x128xi1>, vector<16x128xf32>
    %cst_5 = arith.constant dense<0.000000e+00> : vector<16xf32>
    %16 = vector.multi_reduction <add>, %15, %cst_5 [1] : vector<16x128xf32> to vector<16xf32>
    %17 = vector.shape_cast %16 : vector<16xf32> to vector<16x1xf32>
    %18 = arith.subf %10, %17 : vector<16x1xf32>
    %c0_6 = arith.constant 0 : index
    %c0_7 = arith.constant 0 : index
    %19 = vector.load %arg3[%c0_6, %c0_7] : memref<16x1xf32, #tpu.memory_space<vmem>>, vector<16x1xf32>
    %20 = arith.mulf %18, %19 : vector<16x1xf32>
    %c0_8 = arith.constant 0 : index
    %c0_9 = arith.constant 0 : index
    %21 = vector.load %arg4[%c0_8, %c0_9] : memref<16x1xf32, #tpu.memory_space<vmem>>, vector<16x1xf32>
    tpu.vector_store %arg4[%c0_8, %c0_9], %20 {strides = array<i32>} : memref<16x1xf32, #tpu.memory_space<vmem>>, vector<16x1xf32>,
    return
  }
  func.func @transform_0(%arg0: i32) -> (i32, i32) {
    %c0_i32 = arith.constant 0 : i32
    %c0_i32_0 = arith.constant 0 : i32
    return %arg0, %c0_i32 : i32, i32
  }
  func.func @transform_1(%arg0: i32) -> (i32, i32) {
    %c0_i32 = arith.constant 0 : i32
    %c0_i32_0 = arith.constant 0 : i32
    return %arg0, %c0_i32 : i32, i32
  }
  func.func @transform_2(%arg0: i32) -> (i32, i32) {
    %c0_i32 = arith.constant 0 : i32
    %c0_i32_0 = arith.constant 0 : i32
    return %arg0, %c0_i32 : i32, i32
  }
  func.func @transform_3(%arg0: i32) -> (i32, i32) {
    %c0_i32 = arith.constant 0 : i32
    %c0_i32_0 = arith.constant 0 : i32
    return %arg0, %c0_i32 : i32, i32
  }
}

</mosaic_0001>

<llo_original>
// kernel: tpu_custom_call.1
$region0: #{tpu_custom_call.1}
  #allocation0 [shape = 'u32[]', space=smem, size = 0x4, offset = 0x4, fixed_abs, tag = 'smem constant byte address 0x4 - core index']
  #allocation1 [shape = 'u32[144,128]{1,0:T(1,128)}', space=vmem, size = 0x12000, scoped, tag = 'internal scratch']
  %s0 = inlined_call_operand.vmem [shape: f32[16,128], index: 0, kind: input, shape index: {}]
  %s1 = inlined_call_operand.vmem [shape: s32[16,1], index: 1, kind: input, shape index: {}]
  %s2 = inlined_call_operand.vmem [shape: f32[16,1], index: 2, kind: input, shape index: {}]
  %s3 = inlined_call_operand.vmem [shape: f32[16,1], index: 3, kind: output, shape index: {}]
  %s4 = sld [smem:[#allocation0]]
  $region22: #{tpu_custom_call.1} parent=0
    _
  %s6 = ssub.s32 1, %s4
  %s7 = scalar_select 0, %s6, %s4
  // Predicated region
  $region2: #{tpu_custom_call.1} parent=0 // pred_check
    _
  $region3: #{tpu_custom_call.1} parent=0 // pred_check_branch
    %9 = sbr.rel (0) target = $region5
  $region4: #{tpu_custom_call.1} parent=0 // pred_region
    _
  $region5: #{tpu_custom_call.1} parent=0 // pred_fallthru
    _
  // Predicated region
  $region6: #{tpu_custom_call.1} parent=0 // pred_check
    _
  $region7: #{tpu_custom_call.1} parent=0 // pred_check_branch
    %11 = sbr.rel (0) target = $region9
  $region8: #{tpu_custom_call.1} parent=0 // pred_region
    _
  $region9: #{tpu_custom_call.1} parent=0 // pred_fallthru
    _
  // Predicated region
  $region10: #{tpu_custom_call.1} parent=0 // pred_check
    _
  $region11: #{tpu_custom_call.1} parent=0 // pred_check_branch
    %13 = sbr.rel (0) target = $region13
  $region12: #{tpu_custom_call.1} parent=0 // pred_region
    _
  $region13: #{tpu_custom_call.1} parent=0 // pred_fallthru
    _
  %v14 = vld [vmem:[%s0] sm:$0xff]
  %v15 = vld [vmem:[%s0 + $0x8] sm:$0xff]
  %v16 = vlaneseq
  %v17 = vand.u32 %v16, 127
  %18 = vmax.xlane.f32.xlu0 %v14
  %v19 = vpop.xlane.xlu0 %18
  %20 = vmax.xlane.f32.xlu0 %v15
  %v21 = vpop.xlane.xlu0 %20
  %v22 = vsub.f32 %v14, %v19
  %v23 = vsub.f32 %v15, %v21
  %v24 = vmul.f32 %v22, 1.442695
  %v25 = vpow.pop %v24
  %v26 = vmul.f32 %v23, 1.442695
  %v27 = vpow.pop %v26
  %28 = vadd.xlane.f32.xlu0 %v25
  %v29 = vpop.xlane.xlu0 %28
  %30 = vadd.xlane.f32.xlu0 %v27
  %v31 = vpop.xlane.xlu0 %30
  %v32 = vlog2.pop %v29
  %v33 = vmul.f32 %v32, 0.6931472
  %v34 = vlog2.pop %v31
  %v35 = vmul.f32 %v34, 0.6931472
  %v36 = vadd.f32 %v19, %v33
  %v37 = vadd.f32 %v21, %v35
  %v38 = vld [vmem:[%s1] sm:$0xff]
  %v39 = vld [vmem:[%s1 + $0x8] sm:$0xff]
  %40 = vset.pattern.permute.xlu0 0
  %41 = vperm.xlu0 %40, %v38
  %v42 = vpop.permute.xlu0 %41
  %43 = vset.pattern.permute.xlu0 0
  %44 = vperm.xlu0 %43, %v39
  %v45 = vpop.permute.xlu0 %44
  %vm46 = vcmp.eq.s32.totalorder %v17, %v42
  %vm47 = vcmp.eq.s32.totalorder %v17, %v45
  %v48 = vsel %vm46, %v14, 0.0
  %v49 = vsel %vm47, %v15, 0.0
  %50 = vadd.xlane.f32.xlu0 %v48
  %v51 = vpop.xlane.xlu0 %50
  %52 = vadd.xlane.f32.xlu0 %v49
  %v53 = vpop.xlane.xlu0 %52
  %v54 = vsub.f32 %v36, %v51
  %v55 = vsub.f32 %v37, %v53
  %v56 = vld [vmem:[%s2] sm:$0xff]
  %v57 = vld [vmem:[%s2 + $0x8] sm:$0xff]
  %v58 = vmul.f32 %v54, %v56
  %v59 = vmul.f32 %v55, %v57
  %vm60 = vcmask 7168
  %61 = vst.msk [vmem:[%s3] sm:$0xff] %vm60, %v58
  %62 = vst.msk [vmem:[%s3 + $0x8] sm:$0xff] %vm60, %v59
  // Predicated region
  $region14: #{tpu_custom_call.1} parent=0 // pred_check
    _
  $region15: #{tpu_custom_call.1} parent=0 // pred_check_branch
    %64 = sbr.rel (0) target = $region17
  $region16: #{tpu_custom_call.1} parent=0 // pred_region
    _
  $region17: #{tpu_custom_call.1} parent=0 // pred_fallthru
    _
  // Predicated region
  $region18: #{tpu_custom_call.1} parent=0 // pred_check
    _
  $region19: #{tpu_custom_call.1} parent=0 // pred_check_branch
    %66 = sbr.rel (0) target = $region21
  $region20: #{tpu_custom_call.1} parent=0 // pred_region
    _
  $region21: #{tpu_custom_call.1} parent=0 // pred_fallthru
    _

</llo_original>
